<compile_context>
chip_gen: v5e
topology: v5e:2x2
jax: 0.10.0
libtpu: 0.0.40
codegen_flags: <defaults>
</compile_context>

<pallas_src>
import jax
import jax.numpy as jnp
from jax.experimental import pallas as pl
from jax.experimental.pallas import tpu as pltpu

LANE = 128  # TPU vreg lane width


def mlp_kernel(x_ref, w1_ref, b1_ref, w2_ref, b2_ref, o_ref):
    # Feature-major tiles: x_ref (F_in, Bt), o_ref (F_out, Bt); lane axis = batch.
    x = x_ref[...]                                                    # (4, Bt)
    # Biases are (H, 1)/(F_out, 1); the lane broadcast + add is free VPU filler
    # under the MXU result pops, so it stays fused inside the kernel.
    h = jnp.dot(w1_ref[...], x,
                preferred_element_type=jnp.float32) + b1_ref[...]     # (8, Bt)
    y = jnp.dot(w2_ref[...], h,
                preferred_element_type=jnp.float32) + b2_ref[...]     # (4, Bt)
    o_ref[...] = y.astype(o_ref.dtype)


def mlp_forward(x, w1, b1, w2, b2, *, block_b=65536):
    """x: (B, F_in) row-major.
    w1: (H, F_in), b1: (H, 1), w2: (F_out, H), b2: (F_out, 1)  (PyTorch (out, in) layout).
    Returns (B, F_out) row-major, identical to layer_2(layer_1(x))."""
    assert block_b % LANE == 0
    B, f_in = x.shape
    h_dim, _ = w1.shape
    f_out, _ = w2.shape

    # Pad batch to a lane-aligned tile multiple so every store is a full-width vst.
    b_pad = ((B + LANE - 1) // LANE) * LANE
    bt = min(block_b, b_pad)
    b_pad = ((b_pad + bt - 1) // bt) * bt

    xp = jnp.pad(x, ((0, b_pad - B), (0, 0)))
    x_t = xp.T                                    # (F_in, B_pad): lane axis = batch

    grid = (b_pad // bt,)
    out_t = pl.pallas_call(
        mlp_kernel,
        out_shape=jax.ShapeDtypeStruct((f_out, b_pad), jnp.float32),
        grid_spec=pltpu.PrefetchScalarGridSpec(
            num_scalar_prefetch=0,
            grid=grid,
            in_specs=[
                pl.BlockSpec((f_in, bt), lambda i: (0, i)),       # x^T batch tile (pipelined)
                pl.BlockSpec((h_dim, f_in), lambda i: (0, 0)),    # w1: resident, DMA'd once
                pl.BlockSpec((h_dim, 1), lambda i: (0, 0)),       # b1: resident
                pl.BlockSpec((f_out, h_dim), lambda i: (0, 0)),   # w2: resident
                pl.BlockSpec((f_out, 1), lambda i: (0, 0)),       # b2: resident
            ],
            out_specs=pl.BlockSpec((f_out, bt), lambda i: (0, i)),
        ),
        compiler_params=pltpu.CompilerParams(
            dimension_semantics=("parallel",),    # shard batch tiles across TCs on v7x
        ),
    )(x_t, w1, b1, w2, b2)

    return out_t.T[:B]                            # back to row-major (B, F_out)


def init_params(key):
    """Deterministic init mimicking nn.Linear defaults (uniform(+-1/sqrt(fan_in)))."""
    k1, k2, k3, k4 = jax.random.split(key, 4)
    f_in, h_dim, f_out = 4, 8, 4                  # Linear(4, 8), Linear(8, 4)
    bound1 = 1.0 / jnp.sqrt(f_in)
    bound2 = 1.0 / jnp.sqrt(h_dim)
    # PyTorch (out_features, in_features) weight layout == the feature-major kernel layout.
    w1 = jax.random.uniform(k1, (h_dim, f_in), jnp.float32, -bound1, bound1)
    b1 = jax.random.uniform(k2, (h_dim, 1), jnp.float32, -bound1, bound1)
    w2 = jax.random.uniform(k3, (f_out, h_dim), jnp.float32, -bound2, bound2)
    b2 = jax.random.uniform(k4, (f_out, 1), jnp.float32, -bound2, bound2)
    return w1, b1, w2, b2


if __name__ == "__main__":
    key = jax.random.PRNGKey(0)
    pkey, xkey1, xkey2 = jax.random.split(key, 3)
    w1, b1, w2, b2 = init_params(pkey)

    # Small shape consistent with the module: batch=2, features=4.
    B = 2
    x = jax.random.normal(xkey1, (B, 4), dtype=jnp.float32)
    out = jax.block_until_ready(mlp_forward(x, w1, b1, w2, b2))
    ref = (x @ w1.T + b1[:, 0]) @ w2.T + b2[:, 0]
    assert out.shape == (B, 4)
    assert jnp.allclose(out, ref, atol=1e-5, rtol=1e-5), "mismatch vs reference (B=2)"

    # Extra check: non-aligned batch with >1 grid step exercises the tiling/padding path.
    B2 = 300
    x2 = jax.random.normal(xkey2, (B2, 4), dtype=jnp.float32)
    out2 = jax.block_until_ready(mlp_forward(x2, w1, b1, w2, b2, block_b=128))
    ref2 = (x2 @ w1.T + b1[:, 0]) @ w2.T + b2[:, 0]
    assert out2.shape == (B2, 4)
    assert jnp.allclose(out2, ref2, atol=1e-5, rtol=1e-5), "mismatch vs reference (B=300)"

    print("KERNEL_OK")
</pallas_src>

<mosaic_0001>
module attributes {stable_mosaic.version = 11 : i64} {
  func.func @mlp_kernel(%arg0: i32, %arg1: memref<4x128xf32, #tpu.memory_space<vmem>>, %arg2: memref<8x4xf32, #tpu.memory_space<vmem>>, %arg3: memref<8x1xf32, #tpu.memory_space<vmem>>, %arg4: memref<4x8xf32, #tpu.memory_space<vmem>>, %arg5: memref<4x1xf32, #tpu.memory_space<vmem>>, %arg6: memref<4x128xf32, #tpu.memory_space<vmem>>) attributes {dimension_semantics = [#tpu.dimension_semantics<parallel>], iteration_bounds = array<i64: 1>, scalar_prefetch = 0 : i64, scratch_operands = 0 : i64, tpu.core_type = #tpu.core_type<tc>, window_params = [{transform_indices = @transform_0, window_bounds = array<i64: 4, 128>}, {pipeline_mode = #tpu.pipeline_mode<synchronous>, transform_indices = @transform_1, window_bounds = array<i64: 8, 4>}, {pipeline_mode = #tpu.pipeline_mode<synchronous>, transform_indices = @transform_2, window_bounds = array<i64: 8, 1>}, {pipeline_mode = #tpu.pipeline_mode<synchronous>, transform_indices = @transform_3, window_bounds = array<i64: 4, 8>}, {pipeline_mode = #tpu.pipeline_mode<synchronous>, transform_indices = @transform_4, window_bounds = array<i64: 4, 1>}, {transform_indices = @transform_5, window_bounds = array<i64: 4, 128>}]} {
    %c0 = arith.constant 0 : index
    %c0_0 = arith.constant 0 : index
    %0 = vector.load %arg1[%c0, %c0_0] : memref<4x128xf32, #tpu.memory_space<vmem>>, vector<4x128xf32>
    %c0_1 = arith.constant 0 : index
    %c0_2 = arith.constant 0 : index
    %1 = vector.load %arg2[%c0_1, %c0_2] : memref<8x4xf32, #tpu.memory_space<vmem>>, vector<8x4xf32>
    %cst = arith.constant dense<0.000000e+00> : vector<8x128xf32>
    %2 = tpu.matmul %1, %0, %cst {dimension_numbers = #tpu.dot_dimension_numbers<[1], [0], [0], [1], [0, 0, 1, 1], [], []>} : vector<8x4xf32>, vector<4x128xf32>, vector<8x128xf32> -> vector<8x128xf32>
    %c0_3 = arith.constant 0 : index
    %c0_4 = arith.constant 0 : index
    %3 = vector.load %arg3[%c0_3, %c0_4] : memref<8x1xf32, #tpu.memory_space<vmem>>, vector<8x1xf32>
    %4 = vector.broadcast %3 : vector<8x1xf32> to vector<8x128xf32>
    %5 = arith.addf %2, %4 : vector<8x128xf32>
    %c0_5 = arith.constant 0 : index
    %c0_6 = arith.constant 0 : index
    %6 = vector.load %arg4[%c0_5, %c0_6] : memref<4x8xf32, #tpu.memory_space<vmem>>, vector<4x8xf32>
    %cst_7 = arith.constant dense<0.000000e+00> : vector<4x128xf32>
    %7 = tpu.matmul %6, %5, %cst_7 {dimension_numbers = #tpu.dot_dimension_numbers<[1], [0], [0], [1], [0, 0, 1, 1], [], []>} : vector<4x8xf32>, vector<8x128xf32>, vector<4x128xf32> -> vector<4x128xf32>
    %c0_8 = arith.constant 0 : index
    %c0_9 = arith.constant 0 : index
    %8 = vector.load %arg5[%c0_8, %c0_9] : memref<4x1xf32, #tpu.memory_space<vmem>>, vector<4x1xf32>
    %9 = vector.broadcast %8 : vector<4x1xf32> to vector<4x128xf32>
    %10 = arith.addf %7, %9 : vector<4x128xf32>
    %c0_10 = arith.constant 0 : index
    %c0_11 = arith.constant 0 : index
    %11 = vector.load %arg6[%c0_10, %c0_11] : memref<4x128xf32, #tpu.memory_space<vmem>>, vector<4x128xf32>
    tpu.vector_store %arg6[%c0_10, %c0_11], %10 {strides = array<i32>} : memref<4x128xf32, #tpu.memory_space<vmem>>, vector<4x128xf32>,
    return
  }
  func.func @transform_0(%arg0: i32) -> (i32, i32) {
    %c0_i32 = arith.constant 0 : i32
    %c0_i32_0 = arith.constant 0 : i32
    return %c0_i32, %arg0 : i32, i32
  }
  func.func @transform_1(%arg0: i32) -> (i32, i32) {
    %c0_i32 = arith.constant 0 : i32
    %c0_i32_0 = arith.constant 0 : i32
    %c0_i32_1 = arith.constant 0 : i32
    return %c0_i32, %c0_i32_0 : i32, i32
  }
  func.func @transform_2(%arg0: i32) -> (i32, i32) {
    %c0_i32 = arith.constant 0 : i32
    %c0_i32_0 = arith.constant 0 : i32
    %c0_i32_1 = arith.constant 0 : i32
    return %c0_i32, %c0_i32_0 : i32, i32
  }
  func.func @transform_3(%arg0: i32) -> (i32, i32) {
    %c0_i32 = arith.constant 0 : i32
    %c0_i32_0 = arith.constant 0 : i32
    %c0_i32_1 = arith.constant 0 : i32
    return %c0_i32, %c0_i32_0 : i32, i32
  }
  func.func @transform_4(%arg0: i32) -> (i32, i32) {
    %c0_i32 = arith.constant 0 : i32
    %c0_i32_0 = arith.constant 0 : i32
    %c0_i32_1 = arith.constant 0 : i32
    return %c0_i32, %c0_i32_0 : i32, i32
  }
  func.func @transform_5(%arg0: i32) -> (i32, i32) {
    %c0_i32 = arith.constant 0 : i32
    %c0_i32_0 = arith.constant 0 : i32
    return %c0_i32, %arg0 : i32, i32
  }
}

</mosaic_0001>

<llo_original>
// kernel: tpu_custom_call.1
$region0: #{tpu_custom_call.1}
  #allocation0 [shape = 'u32[]', space=smem, size = 0x4, offset = 0x4, fixed_abs, tag = 'smem constant byte address 0x4 - core index']
  #allocation1 [shape = 'u32[72,128]{1,0:T(1,128)}', space=vmem, size = 0x9000, scoped, tag = 'internal scratch']
  %s0 = inlined_call_operand.vmem [shape: f32[4,128], index: 0, kind: input, shape index: {}]
  %s1 = inlined_call_operand.vmem [shape: f32[8,4], index: 1, kind: input, shape index: {}]
  %s2 = inlined_call_operand.vmem [shape: f32[8,1], index: 2, kind: input, shape index: {}]
  %s3 = inlined_call_operand.vmem [shape: f32[4,8], index: 3, kind: input, shape index: {}]
  %s4 = inlined_call_operand.vmem [shape: f32[4,1], index: 4, kind: input, shape index: {}]
  %s5 = inlined_call_operand.hbm [shape: f32[4,128], index: 5, kind: output, shape index: {}]
  %s6 = sld [smem:[#allocation0]]
  $region30: #{tpu_custom_call.1} parent=0
    _
  %s8 = ssub.s32 1, %s6
  %s9 = scalar_select 0, %s8, %s6
  $region1: #{tpu_custom_call.1} parent=0
    #allocation2 [shape = 'u8[2048]{0}', space=vmem, size = 0x800, scoped, tag = 'output window, operand 0, single buffered']
    #allocation3 [shape = 's32[1]{0}', space=sflag, size = 0x4, scoped, tag = 'scoped memory for tpu_custom_call.1']
    %10 = vsyncpa [#allocation3], 0
    // Predicated region
    $region2: #{tpu_custom_call.1} parent=1 // pred_check
      _
    $region3: #{tpu_custom_call.1} parent=1 // pred_check_branch
      %12 = sbr.rel (0) target = $region5
    $region4: #{tpu_custom_call.1} parent=1 // pred_region
      _
    $region5: #{tpu_custom_call.1} parent=1 // pred_fallthru
      _
    // Predicated region
    $region6: #{tpu_custom_call.1} parent=1 // pred_check
      _
    $region7: #{tpu_custom_call.1} parent=1 // pred_check_branch
      %14 = sbr.rel (0) target = $region9
    $region8: #{tpu_custom_call.1} parent=1 // pred_region
      _
    $region9: #{tpu_custom_call.1} parent=1 // pred_fallthru
      _
    // Predicated region
    $region10: #{tpu_custom_call.1} parent=1 // pred_check
      _
    $region11: #{tpu_custom_call.1} parent=1 // pred_check_branch
      %16 = sbr.rel (0) target = $region13
    $region12: #{tpu_custom_call.1} parent=1 // pred_region
      _
    $region13: #{tpu_custom_call.1} parent=1 // pred_fallthru
      _
    // Predicated region
    $region14: #{tpu_custom_call.1} parent=1 // pred_check
      _
    $region15: #{tpu_custom_call.1} parent=1 // pred_check_branch
      %18 = sbr.rel (0) target = $region17
    $region16: #{tpu_custom_call.1} parent=1 // pred_region
      _
    $region17: #{tpu_custom_call.1} parent=1 // pred_fallthru
      _
    // Predicated region
    $region18: #{tpu_custom_call.1} parent=1 // pred_check
      _
    $region19: #{tpu_custom_call.1} parent=1 // pred_check_branch
      %20 = sbr.rel (0) target = $region21
    $region20: #{tpu_custom_call.1} parent=1 // pred_region
      _
    $region21: #{tpu_custom_call.1} parent=1 // pred_fallthru
      _
    %v21 = vld [vmem:[%s0] sm:$0xf]
    %v22 = vld [vmem:[%s1] sm:$0xff]
    %v23 = vld [vmem:[%s2] sm:$0xff]
    %25 = vset.pattern.permute.xlu0 0
    %26 = vperm.xlu0 %25, %v23
    %v27 = vpop.permute.xlu0 %26
    %vm29 = vcmask 31744
    %v31 = vsel %vm29, %v22, 0
    %vm33 = vcmask 1043456
    %v35 = vsel %vm33, %v21, 0
    %37 = vmatpush.msra.mxu0 0.0
    %38 = vmatpush.msra.mxu0 0.0
    %39 = vmatpush.msra.mxu0 0.0
    %40 = vmatpush.msra.mxu0 0.0
    %41 = vmatpush.msra.mxu0 0.0
    %42 = vmatpush.msra.mxu0 0.0
    %43 = vmatpush.msra.mxu0 0.0
    %44 = vmatpush.msra.mxu0 0.0
    %45 = vmatpush.msra.mxu0 0.0
    %46 = vmatpush.msra.mxu0 0.0
    %47 = vmatpush.msra.mxu0 0.0
    %48 = vmatpush.msra.mxu0 0.0
    %49 = vmatpush.msra.mxu0 0.0
    %50 = vmatpush.msra.mxu0 0.0
    %51 = vmatpush.msra.mxu0 0.0
    %52 = vmatpush.msra.mxu0 %v35
    %53 = vmatmul.f32.gmra.mxu0 %v31
    %v54 = vpop.f32.mrf.mxu0
    %v55 = vadd.f32 %v27, %v54
    %56 = vdwg.mxu0
    %v57 = vld [vmem:[%s3] sm:$0xf]
    %v58 = vld [vmem:[%s4] sm:$0xf]
    %60 = vset.pattern.permute.xlu0 0
    %61 = vperm.xlu0 %60, %v58
    %v62 = vpop.permute.xlu0 %61
    %vm64 = vcmask 64512
    %v66 = vsel %vm64, %v57, 0
    %68 = vmatpush.msra.mxu0 0.0
    %69 = vmatpush.msra.mxu0 0.0
    %70 = vmatpush.msra.mxu0 0.0
    %71 = vmatpush.msra.mxu0 0.0
    %72 = vmatpush.msra.mxu0 0.0
    %73 = vmatpush.msra.mxu0 0.0
    %74 = vmatpush.msra.mxu0 0.0
    %75 = vmatpush.msra.mxu0 0.0
    %76 = vmatpush.msra.mxu0 0.0
    %77 = vmatpush.msra.mxu0 0.0
    %78 = vmatpush.msra.mxu0 0.0
    %79 = vmatpush.msra.mxu0 0.0
    %80 = vmatpush.msra.mxu0 0.0
    %81 = vmatpush.msra.mxu0 0.0
    %82 = vmatpush.msra.mxu0 0.0
    %83 = vmatpush.msra.mxu0 %v55
    %84 = vmatmul.f32.gmra.mxu0 %v66
    %v85 = vpop.f32.mrf.mxu0
    %v86 = vadd.f32 %v62, %v85
    %87 = vdwg.mxu0
    %88 = vst [vmem:[#allocation2] sm:$0xf] %v86
    // Predicated region
    $region22: #{tpu_custom_call.1} parent=1 // pred_check
      _
    $region23: #{tpu_custom_call.1} parent=1 // pred_check_branch
      %90 = sbr.rel (0) target = $region25
    $region24: #{tpu_custom_call.1} parent=1 // pred_region
      %92 = vsyncadd [#allocation3], 0
      %s94 = sshll.u32 [#allocation2], 4
      %s95 = int_to_ptr.vmem [resolvable:$true] %s94
      %s96 = sshll.u32 %s5, 4
      %s97 = int_to_ptr.hbm [resolvable:$true] %s96
      %99 = dma.vmem_to_hbm [thread:$0]  %s95, 64, %s97, [#allocation3]
    $region25: #{tpu_custom_call.1} parent=1 // pred_fallthru
      _
    // Predicated region
    $region26: #{tpu_custom_call.1} parent=1 // pred_check
      _
    $region27: #{tpu_custom_call.1} parent=1 // pred_check_branch
      %101 = sbr.rel (0) target = $region29
    $region28: #{tpu_custom_call.1} parent=1 // pred_region
      %103 = dma.done [#allocation3], 64
    $region29: #{tpu_custom_call.1} parent=1 // pred_fallthru
      _
    %104 = vsyncpa [#allocation3], 1

</llo_original>
